<compile_context>
chip_gen: v7x
topology: tpu7x:2x2x1
jax: 0.10.0
libtpu: 0.0.40
codegen_flags: <defaults>
</compile_context>

<pallas_src>
import functools
import math

import jax
import jax.numpy as jnp
from jax import lax
from jax.experimental import pallas as pl
from jax.experimental.pallas import tpu as pltpu


def _pad_up(n, m):
    return -(-int(n) // int(m)) * int(m)


def _dh_sfnn_chunk_kernel(x_ref, w_in_ref, b_in_ref, beta_ref, alpha_ref,
                          w_out_ref, b_out_ref,
                          o_ref,
                          din_ref, mem_ref, dcur_ref,
                          *, batch, g_steps, num_groups, unroll):
    """One grid step == one chunk of `num_groups * g_steps` timesteps.

    x_ref    : (t_chunk*B, I_pad)   chunk of inputs, row index = t*B + b
    w_in_ref : (I_pad, H_pad)       fused branch weights, pre-scaled by (1-beta)
    b_in_ref : (1, H_pad)           fused branch biases, pre-scaled by (1-beta)
    beta_ref : (1, H_pad)           sigmoid(tau_n)
    alpha_ref: (1, H_pad)           sigmoid(tau_m)
    w_out_ref: (O, H_pad)           readout weights, pre-scaled by (1-alpha)
    b_out_ref: (O, 1)               readout bias (column for lane broadcast)
    o_ref    : (O, t_chunk*B)       lane-dense output slab for this chunk
    din_ref  : (t_chunk*B, H_pad)   VMEM scratch: projection, overwritten in place
                                    with the membrane history (merged din/hist)
    mem_ref  : (B, H_pad)           persistent scratch: mem/(1-alpha) state
    dcur_ref : (B, H_pad)           persistent scratch: dendritic currents
    """
    c = pl.program_id(0)

    # Reset recurrent state at the first chunk (matches torch.zeros re-init).
    @pl.when(c == 0)
    def _():
        mem_ref[...] = jnp.zeros_like(mem_ref)
        dcur_ref[...] = jnp.zeros_like(dcur_ref)

    # ---- Hoisted input projection: one MXU matmul for the whole chunk.
    # (1-beta) is already folded into W_in / b_in, so din == (1-beta)*(x@W + b).
    din_ref[...] = (
        jnp.dot(x_ref[...], w_in_ref[...], preferred_element_type=jnp.float32)
        + b_in_ref[...])

    h = beta_ref.shape[-1]
    beta = jnp.broadcast_to(beta_ref[...], (batch, h))     # hoisted broadcasts
    alpha = jnp.broadcast_to(alpha_ref[...], (batch, h))
    rows = g_steps * batch                                  # multiple of 8 sublanes

    # ---- Serial element-wise recurrence, register-blocked in sublane-aligned
    # groups of g_steps timesteps. History is written back into din_ref in place.
    def group(g, carry):
        mem, dcur = carry
        base = pl.multiple_of(g * rows, rows)
        blk = din_ref[pl.ds(base, rows), :]                 # aligned (rows, H) load
        hist = []
        for j in range(g_steps):                            # vreg-resident steps
            dcur = beta * dcur + blk[j * batch:(j + 1) * batch, :]
            mem = alpha * mem + dcur                        # mem' = mem / (1-alpha)
            hist.append(mem)
        din_ref[pl.ds(base, rows), :] = jnp.concatenate(hist, axis=0)
        return mem, dcur

    mem, dcur = lax.fori_loop(0, num_groups, group,
                              (mem_ref[...], dcur_ref[...]), unroll=unroll)
    mem_ref[...] = mem
    dcur_ref[...] = dcur

    # ---- Deferred, lane-dense readout: (O,H) x (TCB,H)^T -> (O, TCB).
    # (1-alpha) is folded into W_out, so this consumes mem' directly.
    logits = lax.dot_general(
        w_out_ref[...], din_ref[...],
        dimension_numbers=(((1,), (1,)), ((), ())),
        preferred_element_type=jnp.float32)
    o_ref[...] = jax.nn.sigmoid(logits + b_out_ref[...]).astype(o_ref.dtype)


@functools.partial(jax.jit,
                   static_argnames=("t_chunk", "use_bf16", "vmem_budget_bytes"))
def multi_branch_dh_sfnn(x, w_in, b_in, tau_n, w_out, b_out, tau_m,
                         *, t_chunk=None, use_bf16=False,
                         vmem_budget_bytes=48 * 1024 * 1024):
    """x: (batch, seq, input) -> (batch, seq, output_size).

    w_in: (I, H) fused branch weights, b_in/tau_n/tau_m: (H,), w_out: (O, H),
    b_out: (O,). `t_chunk` (if given) is a target chunk length; it is rounded to
    the alignment the kernel needs. `vmem_budget_bytes` bounds the auto chunk size
    (default fits v7x's 64 MiB VMEM; raise it on v5e/v6e for very long sequences).
    """
    B, T, I = x.shape
    H = w_in.shape[1]
    O = w_out.shape[0]

    in_dtype = jnp.bfloat16 if use_bf16 else jnp.float32
    itemsize = 2 if use_bf16 else 4
    k_align = 16 if use_bf16 else 8

    # ---- Lane / contraction padding (review: full-lane recurrence + clean MXU K).
    H_pad = max(_pad_up(H, 128), 128)
    I_pad = _pad_up(I, k_align)

    # ---- Fold the (1-beta)/(1-alpha) scales into the weights (review item).
    beta = jax.nn.sigmoid(tau_n.astype(jnp.float32))           # (H,)
    alpha = jax.nn.sigmoid(tau_m.astype(jnp.float32))          # (H,)
    w_in_f = w_in.astype(jnp.float32) * (1.0 - beta)[None, :]  # (I, H)
    b_in_f = b_in.astype(jnp.float32) * (1.0 - beta)           # (H,)
    w_out_f = w_out.astype(jnp.float32) * (1.0 - alpha)[None, :]  # (O, H)

    # Zero-pad hidden to H_pad lanes, contraction dim to I_pad (padded hidden
    # columns stay identically zero through the whole recurrence/readout).
    w_in_p = jnp.zeros((I_pad, H_pad), jnp.float32).at[:I, :H].set(w_in_f)
    w_in_p = w_in_p.astype(in_dtype)
    b_in_p = jnp.zeros((1, H_pad), jnp.float32).at[0, :H].set(b_in_f)
    beta_p = jnp.zeros((1, H_pad), jnp.float32).at[0, :H].set(beta)
    alpha_p = jnp.zeros((1, H_pad), jnp.float32).at[0, :H].set(alpha)
    w_out_p = jnp.zeros((O, H_pad), jnp.float32).at[:, :H].set(w_out_f)
    b_out_col = b_out.reshape(O, 1).astype(jnp.float32)

    # ---- Group size: smallest number of timesteps whose rows fill whole sublanes.
    g_steps = 8 // math.gcd(B, 8)

    # ---- Chunk sizing from a padded-shape VMEM budget (review item).
    if t_chunk is None:
        per_row = (2 * _pad_up(I_pad, 128) * itemsize       # double-buffered x block
                   + H_pad * 4                              # merged din/hist scratch
                   + 2 * _pad_up(O, 8) * 4)                 # double-buffered out block
        fixed = (2 * (_pad_up(I_pad, 8) * H_pad * itemsize  # W_in
                      + 3 * 8 * H_pad * 4                   # b_in, beta, alpha
                      + _pad_up(O, 8) * (H_pad + 128) * 4)  # W_out, b_out
                 + 2 * _pad_up(B, 8) * H_pad * 4)           # mem / dcur state
        rows_budget = max((vmem_budget_bytes - fixed) // per_row, g_steps * B)
        t_budget = max(int(rows_budget) // B, g_steps)
    else:
        t_budget = max(int(t_chunk), g_steps)

    T_grp = _pad_up(T, g_steps)
    if t_budget >= T_grp:
        t_chunk_eff = T_grp                       # single chunk: block == full array
        num_chunks = 1
    else:
        lane_mult = 128 // math.gcd(B, 128)       # t_chunk*B % 128 == 0
        t_base = lane_mult * g_steps // math.gcd(lane_mult, g_steps)
        t_chunk_eff = max((t_budget // t_base) * t_base, t_base)
        num_chunks = -(-T // t_chunk_eff)
        assert (t_chunk_eff * B) % 128 == 0 and t_chunk_eff % g_steps == 0
    T_pad = num_chunks * t_chunk_eff
    num_groups = t_chunk_eff // g_steps
    tcb = t_chunk_eff * B

    # Unroll the group loop for LLO scheduler visibility.
    if num_groups <= 8:
        unroll = True
    else:
        unroll = next(u for u in (8, 4, 2, 1) if num_groups % u == 0)

    # ---- Layout prep (wrapper-side; no in-kernel reshapes).
    # Padded tail timesteps only update state after the last valid step; that
    # carried state is discarded, and their output columns are sliced off below.
    x_tmajor = jnp.transpose(x, (1, 0, 2)).astype(jnp.float32)   # (T, B, I)
    x_tmajor = jnp.pad(x_tmajor, ((0, T_pad - T), (0, 0), (0, I_pad - I)))
    x_2d = x_tmajor.reshape(T_pad * B, I_pad).astype(in_dtype)   # row = t*B + b

    # ---- VMEM limit from padded shapes (review correctness concern).
    est_vmem = (2 * _pad_up(tcb, 8) * _pad_up(I_pad, 128) * itemsize
                + 2 * _pad_up(O, 8) * _pad_up(tcb, 128) * 4
                + _pad_up(tcb, 8) * H_pad * 4
                + 2 * (_pad_up(I_pad, 8) * H_pad * itemsize
                       + 3 * 8 * H_pad * 4
                       + _pad_up(O, 8) * (H_pad + 128) * 4)
                + 2 * _pad_up(B, 8) * H_pad * 4)
    vmem_limit = int(min(max(est_vmem + est_vmem // 3 + (2 << 20), 16 << 20),
                         96 << 20))

    cost = pl.CostEstimate(
        flops=int(2 * T_pad * B * I_pad * H_pad
                  + 2 * T_pad * B * H_pad * O
                  + 4 * T_pad * B * H_pad),
        transcendentals=int(T_pad * B * O),
        bytes_accessed=int(T_pad * B * I_pad * itemsize
                           + O * T_pad * B * 4
                           + num_chunks * (I_pad * H_pad * itemsize
                                           + (O + 3) * H_pad * 4 + O * 4)),
    )

    kernel = functools.partial(_dh_sfnn_chunk_kernel,
                               batch=B, g_steps=g_steps,
                               num_groups=num_groups, unroll=unroll)

    out_2d = pl.pallas_call(
        kernel,
        out_shape=jax.ShapeDtypeStruct((O, T_pad * B), jnp.float32),
        grid_spec=pltpu.PrefetchScalarGridSpec(
            num_scalar_prefetch=0,
            grid=(num_chunks,),
            in_specs=[
                pl.BlockSpec((tcb, I_pad), lambda c: (c, 0)),     # x chunk
                pl.BlockSpec((I_pad, H_pad), lambda c: (0, 0)),   # W_in  (*(1-beta))
                pl.BlockSpec((1, H_pad), lambda c: (0, 0)),       # b_in  (*(1-beta))
                pl.BlockSpec((1, H_pad), lambda c: (0, 0)),       # beta
                pl.BlockSpec((1, H_pad), lambda c: (0, 0)),       # alpha
                pl.BlockSpec((O, H_pad), lambda c: (0, 0)),       # W_out (*(1-alpha))
                pl.BlockSpec((O, 1), lambda c: (0, 0)),           # b_out
            ],
            out_specs=pl.BlockSpec((O, tcb), lambda c: (0, c)),   # lane-dense slab
            scratch_shapes=[
                pltpu.VMEM((tcb, H_pad), jnp.float32),            # merged din / hist
                pltpu.VMEM((B, H_pad), jnp.float32),              # mem' state
                pltpu.VMEM((B, H_pad), jnp.float32),              # d_currents state
            ],
        ),
        compiler_params=pltpu.CompilerParams(
            dimension_semantics=("arbitrary",),                   # sequential in time
            vmem_limit_bytes=vmem_limit,
        ),
        cost_estimate=cost,
    )(x_2d, w_in_p, b_in_p, beta_p, alpha_p, w_out_p, b_out_col)

    # (O, T_pad*B) -> (B, T, O)
    out = out_2d.reshape(O, T_pad, B)[:, :T, :]
    return jnp.transpose(out, (2, 1, 0))


def init_params(key, input_size=40, hidden_size=64, output_size=1, num_branches=4):
    """Deterministic parameter init mirroring the PyTorch module's __init__."""
    branch_size = hidden_size // num_branches
    keys = jax.random.split(key, 3 * num_branches + 3)

    lim_in = 1.0 / float(jnp.sqrt(float(input_size)))
    w_branches, b_branches, tau_n_branches = [], [], []
    for i in range(num_branches):
        kw, kb, kt = keys[3 * i], keys[3 * i + 1], keys[3 * i + 2]
        w = jax.random.uniform(kw, (branch_size, input_size),
                               minval=-lim_in, maxval=lim_in, dtype=jnp.float32)
        b = jax.random.uniform(kb, (branch_size,),
                               minval=-lim_in, maxval=lim_in, dtype=jnp.float32)
        min_val = -4.0 + 2.0 * i
        tau_n = jax.random.uniform(kt, (branch_size,),
                                   minval=min_val, maxval=min_val + 3.0,
                                   dtype=jnp.float32)
        w_branches.append(w)
        b_branches.append(b)
        tau_n_branches.append(tau_n)

    # Fuse branches: d_in = x @ W_in + b_in partitions hidden columns per branch.
    w_in = jnp.concatenate(w_branches, axis=0).T             # (I, H)
    b_in = jnp.concatenate(b_branches, axis=0)               # (H,)
    tau_n = jnp.concatenate(tau_n_branches, axis=0)          # (H,)

    lim_out = 1.0 / float(jnp.sqrt(float(hidden_size)))
    w_out = jax.random.uniform(keys[-3], (output_size, hidden_size),
                               minval=-lim_out, maxval=lim_out, dtype=jnp.float32)
    b_out = jax.random.uniform(keys[-2], (output_size,),
                               minval=-lim_out, maxval=lim_out, dtype=jnp.float32)
    tau_m = jax.random.uniform(keys[-1], (hidden_size,),
                               minval=0.0, maxval=4.0, dtype=jnp.float32)

    return w_in, b_in, tau_n, w_out, b_out, tau_m


def reference_forward(x, w_in, b_in, tau_n, w_out, b_out, tau_m):
    """Pure-JAX reference replicating the PyTorch loop semantics."""
    B, T, _ = x.shape
    H = w_in.shape[1]
    beta = jax.nn.sigmoid(tau_n)
    alpha = jax.nn.sigmoid(tau_m)

    def step(carry, x_t):
        mem, dcur = carry
        d_in = x_t @ w_in + b_in
        dcur = beta * dcur + (1.0 - beta) * d_in
        mem = alpha * mem + (1.0 - alpha) * dcur
        out = jax.nn.sigmoid(mem @ w_out.T + b_out)
        return (mem, dcur), out

    init = (jnp.zeros((B, H), jnp.float32), jnp.zeros((B, H), jnp.float32))
    _, outs = lax.scan(step, init, jnp.transpose(x, (1, 0, 2)))
    return jnp.transpose(outs, (1, 0, 2))


if __name__ == "__main__":
    key = jax.random.PRNGKey(0)
    k_params, k_x = jax.random.split(key)

    batch, seq_len, input_size = 2, 8, 40
    hidden_size, output_size, num_branches = 64, 1, 4

    params = init_params(k_params, input_size, hidden_size, output_size, num_branches)
    x = jax.random.normal(k_x, (batch, seq_len, input_size), dtype=jnp.float32)

    ref = jax.block_until_ready(reference_forward(x, *params))

    # f32 path (matches module numerics up to re-association from the weight folds).
    out = jax.block_until_ready(multi_branch_dh_sfnn(x, *params))
    assert out.shape == (batch, seq_len, output_size), out.shape
    err = float(jnp.max(jnp.abs(out - ref)))
    assert err < 2e-5, err

    # bf16 streaming-operand path (valid on v5e/v6e/v7x); recurrence stays f32.
    out_bf16 = jax.block_until_ready(multi_branch_dh_sfnn(x, *params, use_bf16=True))
    assert out_bf16.shape == (batch, seq_len, output_size), out_bf16.shape
    err_bf16 = float(jnp.max(jnp.abs(out_bf16 - ref)))
    assert err_bf16 < 5e-2, err_bf16

    print("KERNEL_OK")
</pallas_src>

<mosaic_0001>
module attributes {stable_mosaic.version = 11 : i64} {
  func.func @_dh_sfnn_chunk_kernel(%arg0: i32, %arg1: memref<16x40xf32, #tpu.memory_space<vmem>>, %arg2: memref<40x128xf32, #tpu.memory_space<vmem>>, %arg3: memref<1x128xf32, #tpu.memory_space<vmem>>, %arg4: memref<1x128xf32, #tpu.memory_space<vmem>>, %arg5: memref<1x128xf32, #tpu.memory_space<vmem>>, %arg6: memref<1x128xf32, #tpu.memory_space<vmem>>, %arg7: memref<1x1xf32, #tpu.memory_space<vmem>>, %arg8: memref<1x16xf32, #tpu.memory_space<vmem>>, %arg9: memref<16x128xf32, #tpu.memory_space<vmem>>, %arg10: memref<2x128xf32, #tpu.memory_space<vmem>>, %arg11: memref<2x128xf32, #tpu.memory_space<vmem>>) attributes {dimension_semantics = [#tpu.dimension_semantics<arbitrary>], iteration_bounds = array<i64: 1>, scalar_prefetch = 0 : i64, scratch_operands = 3 : i64, tpu.core_type = #tpu.core_type<tc>, window_params = [{transform_indices = @transform_0, window_bounds = array<i64: 16, 40>}, {pipeline_mode = #tpu.pipeline_mode<synchronous>, transform_indices = @transform_1, window_bounds = array<i64: 40, 128>}, {pipeline_mode = #tpu.pipeline_mode<synchronous>, transform_indices = @transform_2, window_bounds = array<i64: 1, 128>}, {pipeline_mode = #tpu.pipeline_mode<synchronous>, transform_indices = @transform_3, window_bounds = array<i64: 1, 128>}, {pipeline_mode = #tpu.pipeline_mode<synchronous>, transform_indices = @transform_4, window_bounds = array<i64: 1, 128>}, {pipeline_mode = #tpu.pipeline_mode<synchronous>, transform_indices = @transform_5, window_bounds = array<i64: 1, 128>}, {pipeline_mode = #tpu.pipeline_mode<synchronous>, transform_indices = @transform_6, window_bounds = array<i64: 1, 1>}, {transform_indices = @transform_7, window_bounds = array<i64: 1, 16>}]} {
    %c0_i32 = arith.constant 0 : i32
    %0 = arith.cmpi eq, %arg0, %c0_i32 : i32
    %1 = arith.extui %0 : i1 to i32
    %c0_i32_0 = arith.constant 0 : i32
    %2 = arith.cmpi ne, %1, %c0_i32_0 : i32
    scf.if %2 {
      %cst_36 = arith.constant 0.000000e+00 : f32
      %86 = vector.broadcast %cst_36 : f32 to vector<2x128xf32>
      %c0_37 = arith.constant 0 : index
      %c0_38 = arith.constant 0 : index
      %87 = vector.load %arg10[%c0_37, %c0_38] : memref<2x128xf32, #tpu.memory_space<vmem>>, vector<2x128xf32>
      tpu.vector_store %arg10[%c0_37, %c0_38], %86 {strides = array<i32>} : memref<2x128xf32, #tpu.memory_space<vmem>>, vector<2x128xf32>,
      %cst_39 = arith.constant 0.000000e+00 : f32
      %88 = vector.broadcast %cst_39 : f32 to vector<2x128xf32>
      %c0_40 = arith.constant 0 : index
      %c0_41 = arith.constant 0 : index
      %89 = vector.load %arg11[%c0_40, %c0_41] : memref<2x128xf32, #tpu.memory_space<vmem>>, vector<2x128xf32>
      tpu.vector_store %arg11[%c0_40, %c0_41], %88 {strides = array<i32>} : memref<2x128xf32, #tpu.memory_space<vmem>>, vector<2x128xf32>,
    } else {
    }
    %c0 = arith.constant 0 : index
    %c0_1 = arith.constant 0 : index
    %3 = vector.load %arg1[%c0, %c0_1] : memref<16x40xf32, #tpu.memory_space<vmem>>, vector<16x40xf32>
    %c0_2 = arith.constant 0 : index
    %c0_3 = arith.constant 0 : index
    %4 = vector.load %arg2[%c0_2, %c0_3] : memref<40x128xf32, #tpu.memory_space<vmem>>, vector<40x128xf32>
    %cst = arith.constant dense<0.000000e+00> : vector<16x128xf32>
    %5 = tpu.matmul %3, %4, %cst {dimension_numbers = #tpu.dot_dimension_numbers<[1], [0], [0], [1], [0, 0, 1, 1], [], []>} : vector<16x40xf32>, vector<40x128xf32>, vector<16x128xf32> -> vector<16x128xf32>
    %c0_4 = arith.constant 0 : index
    %c0_5 = arith.constant 0 : index
    %6 = vector.load %arg3[%c0_4, %c0_5] : memref<1x128xf32, #tpu.memory_space<vmem>>, vector<1x128xf32>
    %7 = vector.broadcast %6 : vector<1x128xf32> to vector<16x128xf32>
    %8 = arith.addf %5, %7 : vector<16x128xf32>
    %c0_6 = arith.constant 0 : index
    %c0_7 = arith.constant 0 : index
    %9 = vector.load %arg9[%c0_6, %c0_7] : memref<16x128xf32, #tpu.memory_space<vmem>>, vector<16x128xf32>
    tpu.vector_store %arg9[%c0_6, %c0_7], %8 {strides = array<i32>} : memref<16x128xf32, #tpu.memory_space<vmem>>, vector<16x128xf32>,
    %c0_8 = arith.constant 0 : index
    %c0_9 = arith.constant 0 : index
    %10 = vector.load %arg4[%c0_8, %c0_9] : memref<1x128xf32, #tpu.memory_space<vmem>>, vector<1x128xf32>
    %11 = vector.shape_cast %10 : vector<1x128xf32> to vector<1x128xf32>
    %12 = vector.broadcast %11 : vector<1x128xf32> to vector<2x128xf32>
    %c0_10 = arith.constant 0 : index
    %c0_11 = arith.constant 0 : index
    %13 = vector.load %arg5[%c0_10, %c0_11] : memref<1x128xf32, #tpu.memory_space<vmem>>, vector<1x128xf32>
    %14 = vector.shape_cast %13 : vector<1x128xf32> to vector<1x128xf32>
    %15 = vector.broadcast %14 : vector<1x128xf32> to vector<2x128xf32>
    %c0_12 = arith.constant 0 : index
    %c0_13 = arith.constant 0 : index
    %16 = vector.load %arg10[%c0_12, %c0_13] : memref<2x128xf32, #tpu.memory_space<vmem>>, vector<2x128xf32>
    %c0_14 = arith.constant 0 : index
    %c0_15 = arith.constant 0 : index
    %17 = vector.load %arg11[%c0_14, %c0_15] : memref<2x128xf32, #tpu.memory_space<vmem>>, vector<2x128xf32>
    %c0_i32_16 = arith.constant 0 : i32
    %c8_i32 = arith.constant 8 : i32
    %18 = arith.muli %c0_i32_16, %c8_i32 : i32
    %19 = tpu.assume_multiple %18, 8 : i32
    %20 = arith.index_cast %19 : i32 to index
    %c0_17 = arith.constant 0 : index
    %21 = vector.load %arg9[%20, %c0_17] : memref<16x128xf32, #tpu.memory_space<vmem>>, vector<8x128xf32>
    %22 = arith.mulf %12, %17 : vector<2x128xf32>
    %23 = vector.extract_strided_slice %21 {offsets = [0, 0], sizes = [2, 128], strides = [1, 1]} : vector<8x128xf32> to vector<2x128xf32>
    %24 = arith.addf %22, %23 : vector<2x128xf32>
    %25 = arith.mulf %15, %16 : vector<2x128xf32>
    %26 = arith.addf %25, %24 : vector<2x128xf32>
    %27 = arith.mulf %12, %24 : vector<2x128xf32>
    %28 = vector.extract_strided_slice %21 {offsets = [2, 0], sizes = [2, 128], strides = [1, 1]} : vector<8x128xf32> to vector<2x128xf32>
    %29 = arith.addf %27, %28 : vector<2x128xf32>
    %30 = arith.mulf %15, %26 : vector<2x128xf32>
    %31 = arith.addf %30, %29 : vector<2x128xf32>
    %32 = arith.mulf %12, %29 : vector<2x128xf32>
    %33 = vector.extract_strided_slice %21 {offsets = [4, 0], sizes = [2, 128], strides = [1, 1]} : vector<8x128xf32> to vector<2x128xf32>
    %34 = arith.addf %32, %33 : vector<2x128xf32>
    %35 = arith.mulf %15, %31 : vector<2x128xf32>
    %36 = arith.addf %35, %34 : vector<2x128xf32>
    %37 = arith.mulf %12, %34 : vector<2x128xf32>
    %38 = vector.extract_strided_slice %21 {offsets = [6, 0], sizes = [2, 128], strides = [1, 1]} : vector<8x128xf32> to vector<2x128xf32>
    %39 = arith.addf %37, %38 : vector<2x128xf32>
    %40 = arith.mulf %15, %36 : vector<2x128xf32>
    %41 = arith.addf %40, %39 : vector<2x128xf32>
    %42 = tpu.concatenate %26, %31, %36, %41 in 0 : vector<2x128xf32>, vector<2x128xf32>, vector<2x128xf32>, vector<2x128xf32> -> vector<8x128xf32>
    %43 = arith.index_cast %19 : i32 to index
    %c0_18 = arith.constant 0 : index
    %44 = vector.load %arg9[%43, %c0_18] : memref<16x128xf32, #tpu.memory_space<vmem>>, vector<8x128xf32>
    tpu.vector_store %arg9[%43, %c0_18], %42 {strides = array<i32>} : memref<16x128xf32, #tpu.memory_space<vmem>>, vector<8x128xf32>,
    %c1_i32 = arith.constant 1 : i32
    %c8_i32_19 = arith.constant 8 : i32
    %45 = arith.muli %c1_i32, %c8_i32_19 : i32
    %46 = tpu.assume_multiple %45, 8 : i32
    %47 = arith.index_cast %46 : i32 to index
    %c0_20 = arith.constant 0 : index
    %48 = vector.load %arg9[%47, %c0_20] : memref<16x128xf32, #tpu.memory_space<vmem>>, vector<8x128xf32>
    %49 = arith.mulf %12, %39 : vector<2x128xf32>
    %50 = vector.extract_strided_slice %48 {offsets = [0, 0], sizes = [2, 128], strides = [1, 1]} : vector<8x128xf32> to vector<2x128xf32>
    %51 = arith.addf %49, %50 : vector<2x128xf32>
    %52 = arith.mulf %15, %41 : vector<2x128xf32>
    %53 = arith.addf %52, %51 : vector<2x128xf32>
    %54 = arith.mulf %12, %51 : vector<2x128xf32>
    %55 = vector.extract_strided_slice %48 {offsets = [2, 0], sizes = [2, 128], strides = [1, 1]} : vector<8x128xf32> to vector<2x128xf32>
    %56 = arith.addf %54, %55 : vector<2x128xf32>
    %57 = arith.mulf %15, %53 : vector<2x128xf32>
    %58 = arith.addf %57, %56 : vector<2x128xf32>
    %59 = arith.mulf %12, %56 : vector<2x128xf32>
    %60 = vector.extract_strided_slice %48 {offsets = [4, 0], sizes = [2, 128], strides = [1, 1]} : vector<8x128xf32> to vector<2x128xf32>
    %61 = arith.addf %59, %60 : vector<2x128xf32>
    %62 = arith.mulf %15, %58 : vector<2x128xf32>
    %63 = arith.addf %62, %61 : vector<2x128xf32>
    %64 = arith.mulf %12, %61 : vector<2x128xf32>
    %65 = vector.extract_strided_slice %48 {offsets = [6, 0], sizes = [2, 128], strides = [1, 1]} : vector<8x128xf32> to vector<2x128xf32>
    %66 = arith.addf %64, %65 : vector<2x128xf32>
    %67 = arith.mulf %15, %63 : vector<2x128xf32>
    %68 = arith.addf %67, %66 : vector<2x128xf32>
    %69 = tpu.concatenate %53, %58, %63, %68 in 0 : vector<2x128xf32>, vector<2x128xf32>, vector<2x128xf32>, vector<2x128xf32> -> vector<8x128xf32>
    %70 = arith.index_cast %46 : i32 to index
    %c0_21 = arith.constant 0 : index
    %71 = vector.load %arg9[%70, %c0_21] : memref<16x128xf32, #tpu.memory_space<vmem>>, vector<8x128xf32>
    tpu.vector_store %arg9[%70, %c0_21], %69 {strides = array<i32>} : memref<16x128xf32, #tpu.memory_space<vmem>>, vector<8x128xf32>,
    %c2_i32 = arith.constant 2 : i32
    %c0_22 = arith.constant 0 : index
    %c0_23 = arith.constant 0 : index
    %72 = vector.load %arg10[%c0_22, %c0_23] : memref<2x128xf32, #tpu.memory_space<vmem>>, vector<2x128xf32>
    tpu.vector_store %arg10[%c0_22, %c0_23], %68 {strides = array<i32>} : memref<2x128xf32, #tpu.memory_space<vmem>>, vector<2x128xf32>,
    %c0_24 = arith.constant 0 : index
    %c0_25 = arith.constant 0 : index
    %73 = vector.load %arg11[%c0_24, %c0_25] : memref<2x128xf32, #tpu.memory_space<vmem>>, vector<2x128xf32>
    tpu.vector_store %arg11[%c0_24, %c0_25], %66 {strides = array<i32>} : memref<2x128xf32, #tpu.memory_space<vmem>>, vector<2x128xf32>,
    %c0_26 = arith.constant 0 : index
    %c0_27 = arith.constant 0 : index
    %74 = vector.load %arg6[%c0_26, %c0_27] : memref<1x128xf32, #tpu.memory_space<vmem>>, vector<1x128xf32>
    %c0_28 = arith.constant 0 : index
    %c0_29 = arith.constant 0 : index
    %75 = vector.load %arg9[%c0_28, %c0_29] : memref<16x128xf32, #tpu.memory_space<vmem>>, vector<16x128xf32>
    %cst_30 = arith.constant dense<0.000000e+00> : vector<1x16xf32>
    %76 = tpu.matmul %74, %75, %cst_30 {dimension_numbers = #tpu.dot_dimension_numbers<[1], [1], [0], [0], [0, 0, 1, 0], [], []>} : vector<1x128xf32>, vector<16x128xf32>, vector<1x16xf32> -> vector<1x16xf32>
    %c0_31 = arith.constant 0 : index
    %c0_32 = arith.constant 0 : index
    %77 = vector.load %arg7[%c0_31, %c0_32] : memref<1x1xf32, #tpu.memory_space<vmem>>, vector<1x1xf32>
    %78 = vector.broadcast %77 : vector<1x1xf32> to vector<1x16xf32>
    %79 = arith.addf %76, %78 : vector<1x16xf32>
    %80 = arith.negf %79 : vector<1x16xf32>
    %81 = math.exp %80 : vector<1x16xf32>
    %cst_33 = arith.constant 1.000000e+00 : f32
    %82 = vector.broadcast %cst_33 : f32 to vector<1x16xf32>
    %83 = arith.addf %82, %81 : vector<1x16xf32>
    %84 = arith.divf %82, %83 : vector<1x16xf32>
    %c0_34 = arith.constant 0 : index
    %c0_35 = arith.constant 0 : index
    %85 = vector.load %arg8[%c0_34, %c0_35] : memref<1x16xf32, #tpu.memory_space<vmem>>, vector<1x16xf32>
    tpu.vector_store %arg8[%c0_34, %c0_35], %84 {strides = array<i32>} : memref<1x16xf32, #tpu.memory_space<vmem>>, vector<1x16xf32>,
    return
  }
  func.func @transform_0(%arg0: i32) -> (i32, i32) {
    %c0_i32 = arith.constant 0 : i32
    %c0_i32_0 = arith.constant 0 : i32
    return %arg0, %c0_i32 : i32, i32
  }
  func.func @transform_1(%arg0: i32) -> (i32, i32) {
    %c0_i32 = arith.constant 0 : i32
    %c0_i32_0 = arith.constant 0 : i32
    %c0_i32_1 = arith.constant 0 : i32
    return %c0_i32, %c0_i32_0 : i32, i32
  }
  func.func @transform_2(%arg0: i32) -> (i32, i32) {
    %c0_i32 = arith.constant 0 : i32
    %c0_i32_0 = arith.constant 0 : i32
    %c0_i32_1 = arith.constant 0 : i32
    return %c0_i32, %c0_i32_0 : i32, i32
  }
  func.func @transform_3(%arg0: i32) -> (i32, i32) {
    %c0_i32 = arith.constant 0 : i32
    %c0_i32_0 = arith.constant 0 : i32
    %c0_i32_1 = arith.constant 0 : i32
    return %c0_i32, %c0_i32_0 : i32, i32
  }
  func.func @transform_4(%arg0: i32) -> (i32, i32) {
    %c0_i32 = arith.constant 0 : i32
    %c0_i32_0 = arith.constant 0 : i32
    %c0_i32_1 = arith.constant 0 : i32
    return %c0_i32, %c0_i32_0 : i32, i32
  }
  func.func @transform_5(%arg0: i32) -> (i32, i32) {
    %c0_i32 = arith.constant 0 : i32
    %c0_i32_0 = arith.constant 0 : i32
    %c0_i32_1 = arith.constant 0 : i32
    return %c0_i32, %c0_i32_0 : i32, i32
  }
  func.func @transform_6(%arg0: i32) -> (i32, i32) {
    %c0_i32 = arith.constant 0 : i32
    %c0_i32_0 = arith.constant 0 : i32
    %c0_i32_1 = arith.constant 0 : i32
    return %c0_i32, %c0_i32_0 : i32, i32
  }
  func.func @transform_7(%arg0: i32) -> (i32, i32) {
    %c0_i32 = arith.constant 0 : i32
    %c0_i32_0 = arith.constant 0 : i32
    return %c0_i32, %arg0 : i32, i32
  }
}

</mosaic_0001>

<llo_original>
// kernel: multi_branch_dh_sfnn.1
$region0: #{multi_branch_dh_sfnn.1}
  #allocation0 [shape = 'u32[]', space=smem, size = 0x4, offset = 0x4, fixed_abs, tag = 'smem constant byte address 0x4 - core index']
  #allocation1 [shape = 'u32[144,128]{1,0:T(1,128)}', space=vmem, size = 0x12000, scoped, tag = 'internal scratch']
  #allocation2 [shape = 'f32[16,128]{1,0:T(8,128)}', space=vmem, size = 0x2000, scoped, tag = 'scratch operand']
  #allocation3 [shape = 'f32[2,128]{1,0:T(2,128)}', space=vmem, size = 0x400, scoped, tag = 'scratch operand']
  #allocation4 [shape = 'f32[2,128]{1,0:T(2,128)}', space=vmem, size = 0x400, scoped, tag = 'scratch operand']
  #allocation5 [shape = 'f32[1,1]{1,0:T(1,128)S(1)}', space=vmem, size = 0x200, scoped, tag = 'scoped memory for multi_branch_dh_sfnn.1']
  %s0 = inlined_call_operand.vmem [shape: f32[16,40], index: 0, kind: input, shape index: {}]
  %s1 = inlined_call_operand.vmem [shape: f32[40,128], index: 1, kind: input, shape index: {}]
  %s2 = inlined_call_operand.vmem [shape: f32[1,128], index: 2, kind: input, shape index: {}]
  %s3 = inlined_call_operand.vmem [shape: f32[1,128], index: 3, kind: input, shape index: {}]
  %s4 = inlined_call_operand.vmem [shape: f32[1,128], index: 4, kind: input, shape index: {}]
  %s5 = inlined_call_operand.vmem [shape: f32[1,128], index: 5, kind: input, shape index: {}]
  %s6 = inlined_call_operand.<no memory space> [shape: f32[1,1], index: 6, kind: input, shape index: {}]
  %s7 = inlined_call_operand.vmem [shape: f32[1,16], index: 7, kind: output, shape index: {}]
  %s8 = sld [smem:[#allocation0]]
  $region42: #{multi_branch_dh_sfnn.1} parent=0
    _
  %s10 = ssub.s32 1, %s8
  %s11 = scalar_select 0, %s10, %s8
  %v12 = vstv %s6
  %13 = vst [vmem:[#allocation5] sm:$0x1] %v12
  // Predicated region
  $region2: #{multi_branch_dh_sfnn.1} parent=0 // pred_check
    _
  $region3: #{multi_branch_dh_sfnn.1} parent=0 // pred_check_branch
    %15 = sbr.rel (0) target = $region5
  $region4: #{multi_branch_dh_sfnn.1} parent=0 // pred_region
    _
  $region5: #{multi_branch_dh_sfnn.1} parent=0 // pred_fallthru
    _
  // Predicated region
  $region6: #{multi_branch_dh_sfnn.1} parent=0 // pred_check
    _
  $region7: #{multi_branch_dh_sfnn.1} parent=0 // pred_check_branch
    %17 = sbr.rel (0) target = $region9
  $region8: #{multi_branch_dh_sfnn.1} parent=0 // pred_region
    _
  $region9: #{multi_branch_dh_sfnn.1} parent=0 // pred_fallthru
    _
  // Predicated region
  $region10: #{multi_branch_dh_sfnn.1} parent=0 // pred_check
    _
  $region11: #{multi_branch_dh_sfnn.1} parent=0 // pred_check_branch
    %19 = sbr.rel (0) target = $region13
  $region12: #{multi_branch_dh_sfnn.1} parent=0 // pred_region
    _
  $region13: #{multi_branch_dh_sfnn.1} parent=0 // pred_fallthru
    _
  // Predicated region
  $region14: #{multi_branch_dh_sfnn.1} parent=0 // pred_check
    _
  $region15: #{multi_branch_dh_sfnn.1} parent=0 // pred_check_branch
    %21 = sbr.rel (0) target = $region17
  $region16: #{multi_branch_dh_sfnn.1} parent=0 // pred_region
    _
  $region17: #{multi_branch_dh_sfnn.1} parent=0 // pred_fallthru
    _
  // Predicated region
  $region18: #{multi_branch_dh_sfnn.1} parent=0 // pred_check
    _
  $region19: #{multi_branch_dh_sfnn.1} parent=0 // pred_check_branch
    %23 = sbr.rel (0) target = $region21
  $region20: #{multi_branch_dh_sfnn.1} parent=0 // pred_region
    _
  $region21: #{multi_branch_dh_sfnn.1} parent=0 // pred_fallthru
    _
  // Predicated region
  $region22: #{multi_branch_dh_sfnn.1} parent=0 // pred_check
    _
  $region23: #{multi_branch_dh_sfnn.1} parent=0 // pred_check_branch
    %25 = sbr.rel (0) target = $region25
  $region24: #{multi_branch_dh_sfnn.1} parent=0 // pred_region
    _
  $region25: #{multi_branch_dh_sfnn.1} parent=0 // pred_fallthru
    _
  // Predicated region
  $region26: #{multi_branch_dh_sfnn.1} parent=0 // pred_check
    _
  $region27: #{multi_branch_dh_sfnn.1} parent=0 // pred_check_branch
    %27 = sbr.rel (0) target = $region29
  $region28: #{multi_branch_dh_sfnn.1} parent=0 // pred_region
    _
  $region29: #{multi_branch_dh_sfnn.1} parent=0 // pred_fallthru
    _
  %p28 = scmp.eq.s32.totalorder 0, 0
  // Predicated region
  $region30: #{multi_branch_dh_sfnn.1} parent=0 // pred_check
    %p29 = pneg %p28
  $region31: #{multi_branch_dh_sfnn.1} parent=0 // pred_check_branch
    %31 = sbr.rel (%p29) target = $region33
  $region32: #{multi_branch_dh_sfnn.1} parent=0 // pred_region
    %32 = vst [vmem:[#allocation3] sm:$0x3] 0.0
    %33 = vst [vmem:[#allocation4] sm:$0x3] 0.0
  $region33: #{multi_branch_dh_sfnn.1} parent=0 // pred_fallthru
    _
  %v34 = vld [vmem:[%s0] sm:$0xff]
  %v35 = vld [vmem:[%s0 + $0x8] sm:$0xff]
  %v36 = vld [vmem:[%s1] sm:$0xff]
  %v37 = vld [vmem:[%s1 + $0x8] sm:$0xff]
  %v38 = vld [vmem:[%s1 + $0x10] sm:$0xff]
  %v39 = vld [vmem:[%s1 + $0x18] sm:$0xff]
  %v40 = vld [vmem:[%s1 + $0x20] sm:$0xff]
  %v41 = vld [vmem:[%s2] sm:$0x1]
  %v43 = vlaneseq
  %v44 = vshrl.u32 %v43, 7
  %v45 = vsub.s32 0, %v44
  %v46 = vrot.slane %v41, %v45
  %vm48 = vcmask 326656
  %v50 = vsel %vm48, %v34, 0
  %v53 = vsel %vm48, %v35, 0
  %55 = vmatprep.subr.mxu0 0.0
  %56 = vmatpush1.msra.mxu0 %v36
  %57 = vmatprep.subr.mxu0 0.0
  %58 = vmatpush1.msra.mxu0 %v37
  %59 = vmatprep.subr.mxu0 0.0
  %60 = vmatpush1.msra.mxu0 %v38
  %61 = vmatprep.subr.mxu0 0.0
  %62 = vmatpush1.msra.mxu0 %v39
  %63 = vmatprep.subr.mxu0 0.0
  %64 = vmatpush1.msra.mxu0 %v40
  %65 = vmatprep.subr.mxu0 0.0
  %66 = vmatpush1.msra.mxu0 0.0
  %67 = vmatprep.subr.mxu0 0.0
  %68 = vmatpush1.msra.mxu0 0.0
  %69 = vmatprep.subr.mxu0 0.0
  %70 = vmatpush1.msra.mxu0 0.0
  %71 = vmatprep.subr.mxu0 0.0
  %72 = vmatpush1.msra.mxu0 0.0
  %73 = vmatprep.subr.mxu0 0.0
  %74 = vmatpush1.msra.mxu0 0.0
  %75 = vmatprep.subr.mxu0 0.0
  %76 = vmatpush1.msra.mxu0 0.0
  %77 = vmatprep.subr.mxu0 0.0
  %78 = vmatpush1.msra.mxu0 0.0
  %79 = vmatprep.subr.mxu0 0.0
  %80 = vmatpush1.msra.mxu0 0.0
  %81 = vmatprep.subr.mxu0 0.0
  %82 = vmatpush1.msra.mxu0 0.0
  %83 = vmatprep.subr.mxu0 0.0
  %84 = vmatpush1.msra.mxu0 0.0
  %85 = vmatprep.subr.mxu0 0.0
  %86 = vmatpush1.msra.mxu0 0.0
  %87 = vmatprep.subr.mxu0 0.0
  %88 = vmatpush1.msra.mxu0 0.0
  %89 = vmatprep.subr.mxu0 0.0
  %90 = vmatpush1.msra.mxu0 0.0
  %91 = vmatprep.subr.mxu0 0.0
  %92 = vmatpush1.msra.mxu0 0.0
  %93 = vmatprep.subr.mxu0 0.0
  %94 = vmatpush1.msra.mxu0 0.0
  %95 = vmatprep.subr.mxu0 0.0
  %96 = vmatpush1.msra.mxu0 0.0
  %97 = vmatprep.subr.mxu0 0.0
  %98 = vmatpush1.msra.mxu0 0.0
  %99 = vmatprep.subr.mxu0 0.0
  %100 = vmatpush1.msra.mxu0 0.0
  %101 = vmatprep.subr.mxu0 0.0
  %102 = vmatpush1.msra.mxu0 0.0
  %103 = vmatprep.subr.mxu0 0.0
  %104 = vmatpush1.msra.mxu0 0.0
  %105 = vmatprep.subr.mxu0 0.0
  %106 = vmatpush1.msra.mxu0 0.0
  %107 = vmatprep.subr.mxu0 0.0
  %108 = vmatpush1.msra.mxu0 0.0
  %109 = vmatprep.subr.mxu0 0.0
  %110 = vmatpush1.msra.mxu0 0.0
  %111 = vmatprep.subr.mxu0 0.0
  %112 = vmatpush1.msra.mxu0 0.0
  %113 = vmatprep.subr.mxu0 0.0
  %114 = vmatpush1.msra.mxu0 0.0
  %115 = vmatprep.subr.mxu0 0.0
  %116 = vmatpush1.msra.mxu0 0.0
  %117 = vmatprep.subr.mxu0 0.0
  %118 = vmatpush1.msra.mxu0 0.0
  %119 = vmatprep.mubr.f32.mxu0 0.0
  %120 = vmatmul.mubr.f32.gmra.mrb[0].mxu0 %v50
  %v121 = vpop.f32.mrb[0].mxu0
  %v122 = vadd.f32 %v46, %v121
  %v123 = vpop.f32.mrb[0].mxu0
  %124 = vmatprep.mubr.f32.mxu0 0.0
  %125 = vmatmul.mubr.f32.gmra.mrb[0].mxu0 %v53
  %v126 = vpop.f32.mrb[0].mxu0
  %v127 = vadd.f32 %v46, %v126
  %v128 = vpop.f32.mrb[0].mxu0
  %129 = vdwg.mxu0
  %130 = vst [vmem:[#allocation2] sm:$0xff] %v122
  %131 = vst [vmem:[#allocation2 + $0x8] sm:$0xff] %v127
  %v132 = vld [vmem:[%s3] sm:$0x1]
  %v134 = vlaneseq
  %v135 = vshrl.u32 %v134, 7
  %v136 = vsub.s32 0, %v135
  %v137 = vrot.slane %v132, %v136
  %v139 = vld [vmem:[%s4] sm:$0x1]
  %v141 = vlaneseq
  %v142 = vshrl.u32 %v141, 7
  %v143 = vsub.s32 0, %v142
  %v144 = vrot.slane %v139, %v143
  %v146 = vld [vmem:[#allocation3] sm:$0x3]
  %v147 = vld [vmem:[#allocation4] sm:$0x3]
  %v148 = vld [vmem:[#allocation2] sm:$0xff]
  %v149 = vmul.f32 %v137, %v147
  %v150 = vadd.f32 %v149, %v148
  %v151 = vmul.f32 %v144, %v146
  %v152 = vadd.f32 %v151, %v150
  %v153 = vmul.f32 %v137, %v150
  %v155 = vrot.slane %v148, 2
  %v157 = vadd.f32 %v153, %v155
  %v158 = vmul.f32 %v144, %v152
  %v159 = vadd.f32 %v158, %v157
  %v160 = vmul.f32 %v137, %v157
  %v161 = vrot.slane %v148, 4
  %v163 = vadd.f32 %v160, %v161
  %v164 = vmul.f32 %v144, %v159
  %v165 = vadd.f32 %v164, %v163
  %v166 = vmul.f32 %v137, %v163
  %v167 = vrot.slane %v148, 6
  %v169 = vadd.f32 %v166, %v167
  %v170 = vmul.f32 %v144, %v165
  %v171 = vadd.f32 %v170, %v169
  %v173 = vrot.slane %v159, 6
  %v176 = vrot.slane %v165, 4
  %v179 = vrot.slane %v171, 2
  %vm181 = vcmask 1041408
  %v182 = vsel %vm181, %v152, %v173
  %vm183 = vcmask 1043456
  %v184 = vsel %vm183, %v182, %v176
  %vm185 = vcmask 1045504
  %v186 = vsel %vm185, %v184, %v179
  %187 = vst [vmem:[#allocation2] sm:$0xff] %v186
  %s188 = scalar_lea.vmem [#allocation2], 8
  %v189 = vld [vmem:[%s188] sm:$0xff]
  %v190 = vmul.f32 %v137, %v169
  %v191 = vadd.f32 %v190, %v189
  %v192 = vmul.f32 %v144, %v171
  %v193 = vadd.f32 %v192, %v191
  %v194 = vmul.f32 %v137, %v191
  %v196 = vrot.slane %v189, 2
  %v198 = vadd.f32 %v194, %v196
  %v199 = vmul.f32 %v144, %v193
  %v200 = vadd.f32 %v199, %v198
  %v201 = vmul.f32 %v137, %v198
  %v202 = vrot.slane %v189, 4
  %v204 = vadd.f32 %v201, %v202
  %v205 = vmul.f32 %v144, %v200
  %v206 = vadd.f32 %v205, %v204
  %v207 = vmul.f32 %v137, %v204
  %v208 = vrot.slane %v189, 6
  %v210 = vadd.f32 %v207, %v208
  %v211 = vmul.f32 %v144, %v206
  %v212 = vadd.f32 %v211, %v210
  %v214 = vrot.slane %v200, 6
  %v217 = vrot.slane %v206, 4
  %v220 = vrot.slane %v212, 2
  %v222 = vsel %vm181, %v193, %v214
  %v223 = vsel %vm183, %v222, %v217
  %v224 = vsel %vm185, %v223, %v220
  %225 = vst [vmem:[%s188] sm:$0xff] %v224
  %226 = vst [vmem:[#allocation3] sm:$0x3] %v212
  %227 = vst [vmem:[#allocation4] sm:$0x3] %v210
  %v228 = vld [vmem:[%s5] sm:$0x1]
  %v229 = vld [vmem:[#allocation2] sm:$0xff]
  %v230 = vld [vmem:[#allocation2 + $0x8] sm:$0xff]
  %v231 = vld [vmem:[#allocation5] sm:$0x1]
  %233 = vset.pattern.permute.xlu0 0
  %234 = vperm.xlu0 %233, %v231
  %v235 = vpop.permute.xlu0 %234
  %v237 = vlaneseq
  %v238 = vshrl.u32 %v237, 7
  %v239 = vsub.s32 0, %v238
  %v240 = vrot.slane %v235, %v239
  %241 = vmatprep.subr.mxu0 0.0
  %242 = vmatpush1.xpose.msra.mxu0 %v229
  %243 = vmatprep.subr.mxu0 0.0
  %244 = vmatpush1.xpose.msra.mxu0 %v230
  %245 = vmatprep.subr.mxu0 0.0
  %246 = vmatpush1.xpose.msra.mxu0 0.0
  %247 = vmatprep.subr.mxu0 0.0
  %248 = vmatpush1.xpose.msra.mxu0 0.0
  %249 = vmatprep.subr.mxu0 0.0
  %250 = vmatpush1.xpose.msra.mxu0 0.0
  %251 = vmatprep.subr.mxu0 0.0
  %252 = vmatpush1.xpose.msra.mxu0 0.0
  %253 = vmatprep.subr.mxu0 0.0
  %254 = vmatpush1.xpose.msra.mxu0 0.0
  %255 = vmatprep.subr.mxu0 0.0
  %256 = vmatpush1.xpose.msra.mxu0 0.0
  %257 = vmatprep.subr.mxu0 0.0
  %258 = vmatpush1.xpose.msra.mxu0 0.0
  %259 = vmatprep.subr.mxu0 0.0
  %260 = vmatpush1.xpose.msra.mxu0 0.0
  %261 = vmatprep.subr.mxu0 0.0
  %262 = vmatpush1.xpose.msra.mxu0 0.0
  %263 = vmatprep.subr.mxu0 0.0
  %264 = vmatpush1.xpose.msra.mxu0 0.0
  %265 = vmatprep.subr.mxu0 0.0
  %266 = vmatpush1.xpose.msra.mxu0 0.0
  %267 = vmatprep.subr.mxu0 0.0
  %268 = vmatpush1.xpose.msra.mxu0 0.0
  %269 = vmatprep.subr.mxu0 0.0
  %270 = vmatpush1.xpose.msra.mxu0 0.0
  %271 = vmatprep.subr.mxu0 0.0
  %272 = vmatpush1.xpose.msra.mxu0 0.0
  %273 = vmatprep.subr.mxu0 0.0
  %274 = vmatpush1.xpose.msra.mxu0 0.0
  %275 = vmatprep.subr.mxu0 0.0
  %276 = vmatpush1.xpose.msra.mxu0 0.0
  %277 = vmatprep.subr.mxu0 0.0
  %278 = vmatpush1.xpose.msra.mxu0 0.0
  %279 = vmatprep.subr.mxu0 0.0
  %280 = vmatpush1.xpose.msra.mxu0 0.0
  %281 = vmatprep.subr.mxu0 0.0
  %282 = vmatpush1.xpose.msra.mxu0 0.0
  %283 = vmatprep.subr.mxu0 0.0
  %284 = vmatpush1.xpose.msra.mxu0 0.0
  %285 = vmatprep.subr.mxu0 0.0
  %286 = vmatpush1.xpose.msra.mxu0 0.0
  %287 = vmatprep.subr.mxu0 0.0
  %288 = vmatpush1.xpose.msra.mxu0 0.0
  %289 = vmatprep.subr.mxu0 0.0
  %290 = vmatpush1.xpose.msra.mxu0 0.0
  %291 = vmatprep.subr.mxu0 0.0
  %292 = vmatpush1.xpose.msra.mxu0 0.0
  %293 = vmatprep.subr.mxu0 0.0
  %294 = vmatpush1.xpose.msra.mxu0 0.0
  %295 = vmatprep.subr.mxu0 0.0
  %296 = vmatpush1.xpose.msra.mxu0 0.0
  %297 = vmatprep.subr.mxu0 0.0
  %298 = vmatpush1.xpose.msra.mxu0 0.0
  %299 = vmatprep.subr.mxu0 0.0
  %300 = vmatpush1.xpose.msra.mxu0 0.0
  %301 = vmatprep.subr.mxu0 0.0
  %302 = vmatpush1.xpose.msra.mxu0 0.0
  %303 = vmatprep.subr.mxu0 0.0
  %304 = vmatpush1.xpose.msra.mxu0 0.0
  %305 = vmatprep.mubr.f32.mxu0 0.0
  %306 = vmatmul.mubr.f32.gmra.mrb[0].mxu0 %v228
  %v307 = vpop.f32.mrb[0].mxu0
  %v308 = vadd.f32 %v240, %v307
  %v309 = vpop.f32.mrb[0].mxu0
  %310 = vdwg.mxu0
  %v311 = vxor.u32 %v308, 2147483648
  %v312 = vmul.f32 %v311, 1.442695
  %v313 = vpow.pop %v312
  %v314 = vadd.f32 %v313, 1.0
  %v315 = vrcp.pop %v314
  %v316 = vmul.f32 1.0, %v315
  %vm317 = vcmask 122880
  %318 = vst.msk [vmem:[%s7] sm:$0x1] %vm317, %v316
  // Predicated region
  $region34: #{multi_branch_dh_sfnn.1} parent=0 // pred_check
    _
  $region35: #{multi_branch_dh_sfnn.1} parent=0 // pred_check_branch
    %320 = sbr.rel (0) target = $region37
  $region36: #{multi_branch_dh_sfnn.1} parent=0 // pred_region
    _
  $region37: #{multi_branch_dh_sfnn.1} parent=0 // pred_fallthru
    _
  // Predicated region
  $region38: #{multi_branch_dh_sfnn.1} parent=0 // pred_check
    _
  $region39: #{multi_branch_dh_sfnn.1} parent=0 // pred_check_branch
    %322 = sbr.rel (0) target = $region41
  $region40: #{multi_branch_dh_sfnn.1} parent=0 // pred_region
    _
  $region41: #{multi_branch_dh_sfnn.1} parent=0 // pred_fallthru
    _

</llo_original>
